<compile_context>
chip_gen: v6e
topology: v6e:2x2x1
jax: 0.10.0
libtpu: 0.0.40
codegen_flags: <defaults>
</compile_context>

<pallas_src>
import functools

import jax
import jax.numpy as jnp
import numpy as np
from jax.experimental import pallas as pl
from jax.experimental.pallas import tpu as pltpu

_SMEM = pltpu.MemorySpace.SMEM


# ----------------------------------------------------------------------------
# Small helpers for block-size selection
# ----------------------------------------------------------------------------
def _pack_batch(n, per_item_bytes, target_bytes):
    """Largest divisor of n whose block stays under target_bytes (>= 1)."""
    nb = int(max(1, min(n, target_bytes // max(per_item_bytes, 1))))
    while n % nb != 0:
        nb -= 1
    return max(nb, 1)


def _pick_tile(n, quantum, target):
    """Tile size <= target that is a multiple of `quantum` and divides n,
    falling back to the full dim (always legal for a BlockSpec)."""
    if n <= target:
        return n
    t = (target // quantum) * quantum
    while t >= quantum:
        if n % t == 0:
            return t
        t -= quantum
    return n


def _vmem_limit(block_bytes, mult):
    need = mult * block_bytes + (4 << 20)
    return int(min(48 << 20, max(16 << 20, need)))


# ----------------------------------------------------------------------------
# ColorJitter kernel (brightness / contrast / saturation / hue, random order)
# Block layout: (Nb, 3, H, W); per-channel math on dense (Nb, H, W) planes.
# ----------------------------------------------------------------------------
def _rgb_to_gray(r, g, b):
    return 0.2989 * r + 0.587 * g + 0.114 * b


def _adjust_hue_rgb(r, g, b, hue_factor):
    """torchvision adjust_hue on dense (Nb, H, W) per-channel planes.
    Divides go through pl.reciprocal (EUP); channels are returned separately so
    the caller stores them directly (no sublane concat)."""
    maxc = jnp.maximum(jnp.maximum(r, g), b)
    minc = jnp.minimum(jnp.minimum(r, g), b)
    eqc = maxc == minc
    cr = maxc - minc
    ones = jnp.ones_like(maxc)
    inv_max = pl.reciprocal(jnp.where(eqc, ones, maxc), approx=True)
    inv_cr = pl.reciprocal(jnp.where(eqc, ones, cr), approx=True)
    s = cr * inv_max
    rc = (maxc - r) * inv_cr
    gc = (maxc - g) * inv_cr
    bc = (maxc - b) * inv_cr

    r_is_max = maxc == r
    g_is_max = (maxc == g) & (~r_is_max)
    h = jnp.where(r_is_max, bc - gc,
                  jnp.where(g_is_max, 2.0 + rc - bc, 4.0 + gc - rc))
    h = h * (1.0 / 6.0) + 1.0
    h = h - jnp.floor(h)            # fractional part (h >= 0)
    h = h + hue_factor              # hue shift
    h = h - jnp.floor(h)

    # HSV -> RGB
    v = maxc
    h6 = h * 6.0
    i = jnp.floor(h6)
    f = h6 - i
    i = jnp.clip(i, 0.0, 5.0)       # guard the h ~= 1.0 float edge
    p = v * (1.0 - s)
    q = v * (1.0 - s * f)
    t = v * (1.0 - s * (1.0 - f))

    m = [i == float(k) for k in range(6)]   # six sector masks, shared by R/G/B

    def sel(c):
        out = c[5]
        for k in (4, 3, 2, 1, 0):
            out = jnp.where(m[k], c[k], out)
        return out

    return sel([v, q, p, p, t, v]), sel([t, v, v, q, p, p]), sel([p, p, t, v, v, q])


def _color_jitter_kernel(params_ref, x_ref, o_ref, *, order):
    # params_ref: SMEM f32[4] = [brightness, contrast, saturation, hue] factors
    # x_ref/o_ref: VMEM (Nb, 3, H, W) blocks.
    bf = params_ref[0]
    cf = params_ref[1]
    sf = params_ref[2]
    hf = params_ref[3]
    img = x_ref[...]                                # (Nb, 3, H, W)
    r = img[:, 0]                                   # (Nb, H, W) dense planes
    g = img[:, 1]
    b = img[:, 2]
    for op in order:                                # statically unrolled permutation
        if op == 0:       # brightness: blend with zeros
            r = jnp.clip(r * bf, 0.0, 1.0)
            g = jnp.clip(g * bf, 0.0, 1.0)
            b = jnp.clip(b * bf, 0.0, 1.0)
        elif op == 1:     # contrast: blend with per-image grayscale mean
            # TODO(synk): if H is ever tiled for very large images, switch to a
            # two-pass partial-sum scheme to keep the per-image mean exact.
            gray = _rgb_to_gray(r, g, b)
            mean = jnp.mean(gray, axis=(1, 2), keepdims=True)      # (Nb, 1, 1)
            r = jnp.clip(cf * r + (1.0 - cf) * mean, 0.0, 1.0)
            g = jnp.clip(cf * g + (1.0 - cf) * mean, 0.0, 1.0)
            b = jnp.clip(cf * b + (1.0 - cf) * mean, 0.0, 1.0)
        elif op == 2:     # saturation: blend with per-pixel grayscale
            gray = _rgb_to_gray(r, g, b)
            r = jnp.clip(sf * r + (1.0 - sf) * gray, 0.0, 1.0)
            g = jnp.clip(sf * g + (1.0 - sf) * gray, 0.0, 1.0)
            b = jnp.clip(sf * b + (1.0 - sf) * gray, 0.0, 1.0)
        else:             # hue
            r, g, b = _adjust_hue_rgb(r, g, b, hf)
    # Direct per-channel stores (no concat / relayout).
    o_ref[:, 0:1, :, :] = r[:, None].astype(o_ref.dtype)
    o_ref[:, 1:2, :, :] = g[:, None].astype(o_ref.dtype)
    o_ref[:, 2:3, :, :] = b[:, None].astype(o_ref.dtype)


@functools.partial(jax.jit, static_argnames=("order",))
def color_jitter(x, params, *, order):
    """x: (N, 3, H, W); params: f32[4] runtime factors (no recompile per draw);
    order: static permutation of (0,1,2,3) -> at most 24 compiled variants."""
    N, C, H, W = x.shape
    assert C == 3, "ColorJitter expects RGB images"
    per_img = C * H * W * 4
    nb = _pack_batch(N, per_img, target_bytes=2 << 20)
    block = (nb, C, H, W)
    kern = functools.partial(_color_jitter_kernel,
                             order=tuple(int(o) for o in order))
    return pl.pallas_call(
        kern,
        out_shape=jax.ShapeDtypeStruct(x.shape, x.dtype),
        grid=(N // nb,),
        in_specs=[
            pl.BlockSpec(memory_space=_SMEM),       # runtime factors in SMEM
            pl.BlockSpec(block, lambda n: (n, 0, 0, 0)),
        ],
        out_specs=pl.BlockSpec(block, lambda n: (n, 0, 0, 0)),
        compiler_params=pltpu.CompilerParams(
            dimension_semantics=("parallel",),
            vmem_limit_bytes=_vmem_limit(nb * per_img, 12),
        ),
    )(params, x)


# ----------------------------------------------------------------------------
# GaussianBlur kernel (kernel_size=5, separable, reflect padding via XLU rolls)
# ----------------------------------------------------------------------------
def _gaussian_kernel1d(ksize, sigma):
    half = (ksize - 1) * 0.5
    xs = np.linspace(-half, half, ksize)
    pdf = np.exp(-0.5 * (xs / sigma) ** 2)
    return (pdf / pdf.sum()).astype(np.float32)


def _reflect_conv1d(x, taps, axis):
    """1-D conv with torch-style 'reflect' padding along sublane/lane `axis`.
    Bulk term = circular pltpu.roll accumulation (XLU); only the 2*pad boundary
    rows/cols wrap incorrectly and are recomputed exactly and patched with
    jnp.where -- no padded (.., size+2*pad, ..) arrays are materialized."""
    ksize = len(taps)
    pad = ksize // 2
    size = x.shape[axis]

    def shifted(d):                      # x[idx + d] with circular wrap
        if d == 0:
            return x
        return pltpu.roll(x, (-d) % size, axis=axis)

    acc = taps[0] * shifted(-pad)
    for t in range(1, ksize):
        acc = acc + taps[t] * shifted(t - pad)

    def take(i):                         # single row/col along `axis` (tiny slice)
        sl = [slice(None)] * x.ndim
        sl[axis] = slice(i, i + 1)
        return x[tuple(sl)]

    def reflect(m):
        if m < 0:
            return -m
        if m >= size:
            return 2 * (size - 1) - m
        return m

    idx = jax.lax.broadcasted_iota(jnp.int32, x.shape, axis)
    boundary = sorted(set(list(range(pad)) + list(range(max(0, size - pad), size))))
    for r in boundary:
        val = taps[0] * take(reflect(r - pad))
        for t in range(1, ksize):
            val = val + taps[t] * take(reflect(r + t - pad))
        acc = jnp.where(idx == r, val, acc)
    return acc


def _gaussian_blur_kernel(k_ref, x_ref, o_ref, *, ksize):
    # k_ref: SMEM f32[ksize] Gaussian taps (runtime sigma -> no recompile)
    # x_ref/o_ref: VMEM (Nb, C, H, W) blocks.
    # TODO(synk): for very large images (v7x 64 MiB VMEM) tile H across a second
    # grid axis with a 2-row halo instead of whole-image blocks.
    taps = [k_ref[i] for i in range(ksize)]
    nb, c, h, w = x_ref.shape
    x = x_ref[...].reshape(nb * c, h, w)          # merge untiled leading dims (free)
    acc = _reflect_conv1d(x, taps, axis=1)        # vertical pass  (sublane rolls)
    out = _reflect_conv1d(acc, taps, axis=2)      # horizontal pass (lane rolls)
    o_ref[...] = out.reshape(nb, c, h, w).astype(o_ref.dtype)


@jax.jit
def gaussian_blur(x, taps):
    """x: (N, C, H, W); taps: f32[ksize] separable Gaussian kernel (runtime)."""
    N, C, H, W = x.shape
    ksize = int(taps.shape[0])
    per_img = C * H * W * 4
    nb = _pack_batch(N, per_img, target_bytes=2 << 20)
    block = (nb, C, H, W)
    kern = functools.partial(_gaussian_blur_kernel, ksize=ksize)
    return pl.pallas_call(
        kern,
        out_shape=jax.ShapeDtypeStruct(x.shape, x.dtype),
        grid=(N // nb,),
        in_specs=[
            pl.BlockSpec(memory_space=_SMEM),       # runtime taps in SMEM
            pl.BlockSpec(block, lambda n: (n, 0, 0, 0)),
        ],
        out_specs=pl.BlockSpec(block, lambda n: (n, 0, 0, 0)),
        compiler_params=pltpu.CompilerParams(
            dimension_semantics=("parallel",),
            vmem_limit_bytes=_vmem_limit(nb * per_img, 16),
        ),
    )(taps, x)


# ----------------------------------------------------------------------------
# RandomInvert(p=1) kernel -- elementwise, tiled lane-dense 2-D grid.
# ----------------------------------------------------------------------------
def _invert_kernel(x_ref, o_ref):
    o_ref[...] = (1.0 - x_ref[...]).astype(o_ref.dtype)   # bound = 1.0 for float


@jax.jit
def invert(x):
    shape = x.shape
    total = int(np.prod(shape))
    cols = None
    for lanes in (2048, 1024, 512, 256, 128):
        if total % lanes == 0:
            cols = lanes
            break
    if cols is None:
        rows, cols = shape[0] * shape[1], int(np.prod(shape[2:]))
    else:
        rows = total // cols
    xf = x.reshape(rows, cols)
    br = _pick_tile(rows, 8, 256)
    bc = _pick_tile(cols, 128, 2048)
    out = pl.pallas_call(
        _invert_kernel,
        out_shape=jax.ShapeDtypeStruct((rows, cols), x.dtype),
        grid=(rows // br, cols // bc),
        in_specs=[pl.BlockSpec((br, bc), lambda i, j: (i, j))],
        out_specs=pl.BlockSpec((br, bc), lambda i, j: (i, j)),
        compiler_params=pltpu.CompilerParams(
            dimension_semantics=("parallel", "parallel")),
    )(xf)
    return out.reshape(shape)


# ----------------------------------------------------------------------------
# Transforms + RandomApply: parameters are re-sampled on every call (host side,
# like torchvision), but since they are runtime SMEM inputs the kernels do NOT
# recompile per draw.
# ----------------------------------------------------------------------------
class ColorJitter:
    """ColorJitter(brightness=0.5, contrast=0.8, saturation=0.8, hue=0.4)."""

    def __init__(self, rng, brightness=0.5, contrast=0.8, saturation=0.8, hue=0.4):
        self._rng = rng
        self.brightness = (max(0.0, 1.0 - brightness), 1.0 + brightness)
        self.contrast = (max(0.0, 1.0 - contrast), 1.0 + contrast)
        self.saturation = (max(0.0, 1.0 - saturation), 1.0 + saturation)
        self.hue = (-hue, hue)

    def __call__(self, images):
        order = tuple(int(v) for v in self._rng.permutation(4))
        params = jnp.asarray(
            [self._rng.uniform(*self.brightness),
             self._rng.uniform(*self.contrast),
             self._rng.uniform(*self.saturation),
             self._rng.uniform(*self.hue)],
            dtype=jnp.float32)
        return color_jitter(images, params, order=order)


class GaussianBlur:
    """GaussianBlur(kernel_size=5, sigma=(1, 2))."""

    def __init__(self, rng, kernel_size=5, sigma=(1.0, 2.0)):
        self._rng = rng
        self.kernel_size = kernel_size
        self.sigma = sigma

    def __call__(self, images):
        sigma = float(self._rng.uniform(self.sigma[0], self.sigma[1]))
        taps = jnp.asarray(_gaussian_kernel1d(self.kernel_size, sigma))
        return gaussian_blur(images, taps)


class RandomInvert:
    """RandomInvert(p=1): always inverts (rand() < 1.0 is always true)."""

    def __init__(self, rng, p=1.0):
        self._rng = rng
        self.p = p

    def __call__(self, images):
        if self._rng.random() < self.p:
            return invert(images)
        return images


class RandomApply:
    def __init__(self, transform_list=None, p=None, seed=0):
        self._rng = np.random.default_rng(seed)
        if transform_list is None:
            transform_list = [
                ColorJitter(self._rng, brightness=0.5, contrast=0.8,
                            saturation=0.8, hue=0.4),
                GaussianBlur(self._rng, kernel_size=5, sigma=(1.0, 2.0)),
                RandomInvert(self._rng, p=1.0),
            ]
            p = np.array([0.4, 0.2, 0.01])
        if not isinstance(p, np.ndarray):
            p = np.array(p)
        self.p = p
        self.transforms = transform_list

    def __call__(self, images):
        # TODO(synk): transform selection is host Python control flow on a host
        # random scalar, exactly as in the reference forward (np.random.rand()).
        random_num = self._rng.random()
        cumulative_prob = 0.0
        for t, t_prob in zip(self.transforms, self.p):
            cumulative_prob += t_prob
            if random_num < cumulative_prob:
                return t(images)
        return images


# ----------------------------------------------------------------------------
# Host-side numpy reference for the reflect-padded separable blur (sanity only)
# ----------------------------------------------------------------------------
def _gaussian_blur_ref(x, taps):
    pad = len(taps) // 2
    H, W = x.shape[2], x.shape[3]
    xp = np.pad(x, ((0, 0), (0, 0), (pad, pad), (0, 0)), mode="reflect")
    acc = sum(taps[i] * xp[:, :, i:i + H, :] for i in range(len(taps)))
    ap = np.pad(acc, ((0, 0), (0, 0), (0, 0), (pad, pad)), mode="reflect")
    return sum(taps[j] * ap[:, :, :, j:j + W] for j in range(len(taps)))


if __name__ == "__main__":
    key = jax.random.PRNGKey(0)
    # NCHW float32 images in [0, 1], RGB (C=3) as the default transforms require.
    images = jax.random.uniform(key, (2, 3, 128, 128), dtype=jnp.float32)

    aug = RandomApply(seed=0)

    # Invert: exact check.
    inv = invert(images)
    jax.block_until_ready(inv)
    assert bool(jnp.allclose(inv, 1.0 - images, atol=1e-6))

    # GaussianBlur: roll + boundary fix-up vs numpy reflect-pad reference.
    taps = jnp.asarray(_gaussian_kernel1d(5, 1.5))
    blurred = gaussian_blur(images, taps)
    jax.block_until_ready(blurred)
    ref = _gaussian_blur_ref(np.asarray(images), np.asarray(taps))
    assert np.allclose(np.asarray(blurred), ref, rtol=1e-4, atol=1e-4)

    # Exercise each transform once (sanity), then run the RandomApply forward.
    for t in aug.transforms:
        out = t(images)
        jax.block_until_ready(out)
        assert out.shape == images.shape and out.dtype == images.dtype
        assert bool(jnp.all(jnp.isfinite(out)))

    result = aug(images)
    jax.block_until_ready(result)
    assert result.shape == images.shape and result.dtype == images.dtype
    print("KERNEL_OK")
</pallas_src>

<mosaic_0001>
module attributes {stable_mosaic.version = 11 : i64} {
  func.func @_invert_kernel(%arg0: i32, %arg1: i32, %arg2: memref<48x2048xf32, #tpu.memory_space<vmem>>, %arg3: memref<48x2048xf32, #tpu.memory_space<vmem>>) attributes {dimension_semantics = [#tpu.dimension_semantics<parallel>, #tpu.dimension_semantics<parallel>], iteration_bounds = array<i64: 1, 1>, scalar_prefetch = 0 : i64, scratch_operands = 0 : i64, tpu.core_type = #tpu.core_type<tc>, window_params = [{transform_indices = @transform_0, window_bounds = array<i64: 48, 2048>}, {transform_indices = @transform_1, window_bounds = array<i64: 48, 2048>}]} {
    %c0 = arith.constant 0 : index
    %c0_0 = arith.constant 0 : index
    %0 = vector.load %arg2[%c0, %c0_0] : memref<48x2048xf32, #tpu.memory_space<vmem>>, vector<48x2048xf32>
    %cst = arith.constant 1.000000e+00 : f32
    %1 = vector.broadcast %cst : f32 to vector<48x2048xf32>
    %2 = arith.subf %1, %0 : vector<48x2048xf32>
    %c0_1 = arith.constant 0 : index
    %c0_2 = arith.constant 0 : index
    %3 = vector.load %arg3[%c0_1, %c0_2] : memref<48x2048xf32, #tpu.memory_space<vmem>>, vector<48x2048xf32>
    tpu.vector_store %arg3[%c0_1, %c0_2], %2 {strides = array<i32>} : memref<48x2048xf32, #tpu.memory_space<vmem>>, vector<48x2048xf32>,
    return
  }
  func.func @transform_0(%arg0: i32, %arg1: i32) -> (i32, i32) {
    %c0_i32 = arith.constant 0 : i32
    return %arg0, %arg1 : i32, i32
  }
  func.func @transform_1(%arg0: i32, %arg1: i32) -> (i32, i32) {
    %c0_i32 = arith.constant 0 : i32
    return %arg0, %arg1 : i32, i32
  }
}

</mosaic_0001>

<llo_original>
// kernel: invert.1
$region0: #{invert.1}
  #allocation0 [shape = 'u32[]', space=smem, size = 0x4, offset = 0x4, fixed_abs, tag = 'smem constant byte address 0x4 - core index']
  #allocation1 [shape = 'u32[144,128]{1,0:T(1,128)}', space=vmem, size = 0x12000, scoped, tag = 'internal scratch']
  %s0 = inlined_call_operand.vmem [shape: f32[48,2048], index: 0, kind: input, shape index: {}]
  %s1 = inlined_call_operand.vmem [shape: f32[48,2048], index: 1, kind: output, shape index: {}]
  %s2 = sld [smem:[#allocation0]]
  $region14: #{invert.1} parent=0
    _
  %s4 = ssub.s32 1, %s2
  %s5 = scalar_select 0, %s4, %s2
  // Predicated region
  $region2: #{invert.1} parent=0 // pred_check
    _
  $region3: #{invert.1} parent=0 // pred_check_branch
    %7 = sbr.rel (0) target = $region5
  $region4: #{invert.1} parent=0 // pred_region
    _
  $region5: #{invert.1} parent=0 // pred_fallthru
    _
  %v8 = vld [vmem:[%s0] sm:$0xff]
  %v9 = vld [vmem:[%s0 + $0x8] sm:$0xff]
  %v10 = vld [vmem:[%s0 + $0x10] sm:$0xff]
  %v11 = vld [vmem:[%s0 + $0x18] sm:$0xff]
  %v12 = vld [vmem:[%s0 + $0x20] sm:$0xff]
  %v13 = vld [vmem:[%s0 + $0x28] sm:$0xff]
  %v14 = vld [vmem:[%s0 + $0x30] sm:$0xff]
  %v15 = vld [vmem:[%s0 + $0x38] sm:$0xff]
  %v16 = vld [vmem:[%s0 + $0x40] sm:$0xff]
  %v17 = vld [vmem:[%s0 + $0x48] sm:$0xff]
  %v18 = vld [vmem:[%s0 + $0x50] sm:$0xff]
  %v19 = vld [vmem:[%s0 + $0x58] sm:$0xff]
  %v20 = vld [vmem:[%s0 + $0x60] sm:$0xff]
  %v21 = vld [vmem:[%s0 + $0x68] sm:$0xff]
  %v22 = vld [vmem:[%s0 + $0x70] sm:$0xff]
  %v23 = vld [vmem:[%s0 + $0x78] sm:$0xff]
  %v24 = vld [vmem:[%s0 + $0x80] sm:$0xff]
  %v25 = vld [vmem:[%s0 + $0x88] sm:$0xff]
  %v26 = vld [vmem:[%s0 + $0x90] sm:$0xff]
  %v27 = vld [vmem:[%s0 + $0x98] sm:$0xff]
  %v28 = vld [vmem:[%s0 + $0xa0] sm:$0xff]
  %v29 = vld [vmem:[%s0 + $0xa8] sm:$0xff]
  %v30 = vld [vmem:[%s0 + $0xb0] sm:$0xff]
  %v31 = vld [vmem:[%s0 + $0xb8] sm:$0xff]
  %v32 = vld [vmem:[%s0 + $0xc0] sm:$0xff]
  %v33 = vld [vmem:[%s0 + $0xc8] sm:$0xff]
  %v34 = vld [vmem:[%s0 + $0xd0] sm:$0xff]
  %v35 = vld [vmem:[%s0 + $0xd8] sm:$0xff]
  %v36 = vld [vmem:[%s0 + $0xe0] sm:$0xff]
  %v37 = vld [vmem:[%s0 + $0xe8] sm:$0xff]
  %v38 = vld [vmem:[%s0 + $0xf0] sm:$0xff]
  %v39 = vld [vmem:[%s0 + $0xf8] sm:$0xff]
  %v40 = vld [vmem:[%s0 + $0x100] sm:$0xff]
  %v41 = vld [vmem:[%s0 + $0x108] sm:$0xff]
  %v42 = vld [vmem:[%s0 + $0x110] sm:$0xff]
  %v43 = vld [vmem:[%s0 + $0x118] sm:$0xff]
  %v44 = vld [vmem:[%s0 + $0x120] sm:$0xff]
  %v45 = vld [vmem:[%s0 + $0x128] sm:$0xff]
  %v46 = vld [vmem:[%s0 + $0x130] sm:$0xff]
  %v47 = vld [vmem:[%s0 + $0x138] sm:$0xff]
  %v48 = vld [vmem:[%s0 + $0x140] sm:$0xff]
  %v49 = vld [vmem:[%s0 + $0x148] sm:$0xff]
  %v50 = vld [vmem:[%s0 + $0x150] sm:$0xff]
  %v51 = vld [vmem:[%s0 + $0x158] sm:$0xff]
  %v52 = vld [vmem:[%s0 + $0x160] sm:$0xff]
  %v53 = vld [vmem:[%s0 + $0x168] sm:$0xff]
  %v54 = vld [vmem:[%s0 + $0x170] sm:$0xff]
  %v55 = vld [vmem:[%s0 + $0x178] sm:$0xff]
  %v56 = vld [vmem:[%s0 + $0x180] sm:$0xff]
  %v57 = vld [vmem:[%s0 + $0x188] sm:$0xff]
  %v58 = vld [vmem:[%s0 + $0x190] sm:$0xff]
  %v59 = vld [vmem:[%s0 + $0x198] sm:$0xff]
  %v60 = vld [vmem:[%s0 + $0x1a0] sm:$0xff]
  %v61 = vld [vmem:[%s0 + $0x1a8] sm:$0xff]
  %v62 = vld [vmem:[%s0 + $0x1b0] sm:$0xff]
  %v63 = vld [vmem:[%s0 + $0x1b8] sm:$0xff]
  %v64 = vld [vmem:[%s0 + $0x1c0] sm:$0xff]
  %v65 = vld [vmem:[%s0 + $0x1c8] sm:$0xff]
  %v66 = vld [vmem:[%s0 + $0x1d0] sm:$0xff]
  %v67 = vld [vmem:[%s0 + $0x1d8] sm:$0xff]
  %v68 = vld [vmem:[%s0 + $0x1e0] sm:$0xff]
  %v69 = vld [vmem:[%s0 + $0x1e8] sm:$0xff]
  %v70 = vld [vmem:[%s0 + $0x1f0] sm:$0xff]
  %v71 = vld [vmem:[%s0 + $0x1f8] sm:$0xff]
  %v72 = vld [vmem:[%s0 + $0x200] sm:$0xff]
  %v73 = vld [vmem:[%s0 + $0x208] sm:$0xff]
  %v74 = vld [vmem:[%s0 + $0x210] sm:$0xff]
  %v75 = vld [vmem:[%s0 + $0x218] sm:$0xff]
  %v76 = vld [vmem:[%s0 + $0x220] sm:$0xff]
  %v77 = vld [vmem:[%s0 + $0x228] sm:$0xff]
  %v78 = vld [vmem:[%s0 + $0x230] sm:$0xff]
  %v79 = vld [vmem:[%s0 + $0x238] sm:$0xff]
  %v80 = vld [vmem:[%s0 + $0x240] sm:$0xff]
  %v81 = vld [vmem:[%s0 + $0x248] sm:$0xff]
  %v82 = vld [vmem:[%s0 + $0x250] sm:$0xff]
  %v83 = vld [vmem:[%s0 + $0x258] sm:$0xff]
  %v84 = vld [vmem:[%s0 + $0x260] sm:$0xff]
  %v85 = vld [vmem:[%s0 + $0x268] sm:$0xff]
  %v86 = vld [vmem:[%s0 + $0x270] sm:$0xff]
  %v87 = vld [vmem:[%s0 + $0x278] sm:$0xff]
  %v88 = vld [vmem:[%s0 + $0x280] sm:$0xff]
  %v89 = vld [vmem:[%s0 + $0x288] sm:$0xff]
  %v90 = vld [vmem:[%s0 + $0x290] sm:$0xff]
  %v91 = vld [vmem:[%s0 + $0x298] sm:$0xff]
  %v92 = vld [vmem:[%s0 + $0x2a0] sm:$0xff]
  %v93 = vld [vmem:[%s0 + $0x2a8] sm:$0xff]
  %v94 = vld [vmem:[%s0 + $0x2b0] sm:$0xff]
  %v95 = vld [vmem:[%s0 + $0x2b8] sm:$0xff]
  %v96 = vld [vmem:[%s0 + $0x2c0] sm:$0xff]
  %v97 = vld [vmem:[%s0 + $0x2c8] sm:$0xff]
  %v98 = vld [vmem:[%s0 + $0x2d0] sm:$0xff]
  %v99 = vld [vmem:[%s0 + $0x2d8] sm:$0xff]
  %v100 = vld [vmem:[%s0 + $0x2e0] sm:$0xff]
  %v101 = vld [vmem:[%s0 + $0x2e8] sm:$0xff]
  %v102 = vld [vmem:[%s0 + $0x2f0] sm:$0xff]
  %v103 = vld [vmem:[%s0 + $0x2f8] sm:$0xff]
  %v104 = vsub.f32 1.0, %v8
  %v105 = vsub.f32 1.0, %v9
  %v106 = vsub.f32 1.0, %v10
  %v107 = vsub.f32 1.0, %v11
  %v108 = vsub.f32 1.0, %v12
  %v109 = vsub.f32 1.0, %v13
  %v110 = vsub.f32 1.0, %v14
  %v111 = vsub.f32 1.0, %v15
  %v112 = vsub.f32 1.0, %v16
  %v113 = vsub.f32 1.0, %v17
  %v114 = vsub.f32 1.0, %v18
  %v115 = vsub.f32 1.0, %v19
  %v116 = vsub.f32 1.0, %v20
  %v117 = vsub.f32 1.0, %v21
  %v118 = vsub.f32 1.0, %v22
  %v119 = vsub.f32 1.0, %v23
  %v120 = vsub.f32 1.0, %v24
  %v121 = vsub.f32 1.0, %v25
  %v122 = vsub.f32 1.0, %v26
  %v123 = vsub.f32 1.0, %v27
  %v124 = vsub.f32 1.0, %v28
  %v125 = vsub.f32 1.0, %v29
  %v126 = vsub.f32 1.0, %v30
  %v127 = vsub.f32 1.0, %v31
  %v128 = vsub.f32 1.0, %v32
  %v129 = vsub.f32 1.0, %v33
  %v130 = vsub.f32 1.0, %v34
  %v131 = vsub.f32 1.0, %v35
  %v132 = vsub.f32 1.0, %v36
  %v133 = vsub.f32 1.0, %v37
  %v134 = vsub.f32 1.0, %v38
  %v135 = vsub.f32 1.0, %v39
  %v136 = vsub.f32 1.0, %v40
  %v137 = vsub.f32 1.0, %v41
  %v138 = vsub.f32 1.0, %v42
  %v139 = vsub.f32 1.0, %v43
  %v140 = vsub.f32 1.0, %v44
  %v141 = vsub.f32 1.0, %v45
  %v142 = vsub.f32 1.0, %v46
  %v143 = vsub.f32 1.0, %v47
  %v144 = vsub.f32 1.0, %v48
  %v145 = vsub.f32 1.0, %v49
  %v146 = vsub.f32 1.0, %v50
  %v147 = vsub.f32 1.0, %v51
  %v148 = vsub.f32 1.0, %v52
  %v149 = vsub.f32 1.0, %v53
  %v150 = vsub.f32 1.0, %v54
  %v151 = vsub.f32 1.0, %v55
  %v152 = vsub.f32 1.0, %v56
  %v153 = vsub.f32 1.0, %v57
  %v154 = vsub.f32 1.0, %v58
  %v155 = vsub.f32 1.0, %v59
  %v156 = vsub.f32 1.0, %v60
  %v157 = vsub.f32 1.0, %v61
  %v158 = vsub.f32 1.0, %v62
  %v159 = vsub.f32 1.0, %v63
  %v160 = vsub.f32 1.0, %v64
  %v161 = vsub.f32 1.0, %v65
  %v162 = vsub.f32 1.0, %v66
  %v163 = vsub.f32 1.0, %v67
  %v164 = vsub.f32 1.0, %v68
  %v165 = vsub.f32 1.0, %v69
  %v166 = vsub.f32 1.0, %v70
  %v167 = vsub.f32 1.0, %v71
  %v168 = vsub.f32 1.0, %v72
  %v169 = vsub.f32 1.0, %v73
  %v170 = vsub.f32 1.0, %v74
  %v171 = vsub.f32 1.0, %v75
  %v172 = vsub.f32 1.0, %v76
  %v173 = vsub.f32 1.0, %v77
  %v174 = vsub.f32 1.0, %v78
  %v175 = vsub.f32 1.0, %v79
  %v176 = vsub.f32 1.0, %v80
  %v177 = vsub.f32 1.0, %v81
  %v178 = vsub.f32 1.0, %v82
  %v179 = vsub.f32 1.0, %v83
  %v180 = vsub.f32 1.0, %v84
  %v181 = vsub.f32 1.0, %v85
  %v182 = vsub.f32 1.0, %v86
  %v183 = vsub.f32 1.0, %v87
  %v184 = vsub.f32 1.0, %v88
  %v185 = vsub.f32 1.0, %v89
  %v186 = vsub.f32 1.0, %v90
  %v187 = vsub.f32 1.0, %v91
  %v188 = vsub.f32 1.0, %v92
  %v189 = vsub.f32 1.0, %v93
  %v190 = vsub.f32 1.0, %v94
  %v191 = vsub.f32 1.0, %v95
  %v192 = vsub.f32 1.0, %v96
  %v193 = vsub.f32 1.0, %v97
  %v194 = vsub.f32 1.0, %v98
  %v195 = vsub.f32 1.0, %v99
  %v196 = vsub.f32 1.0, %v100
  %v197 = vsub.f32 1.0, %v101
  %v198 = vsub.f32 1.0, %v102
  %v199 = vsub.f32 1.0, %v103
  %200 = vst [vmem:[%s1] sm:$0xff] %v104
  %201 = vst [vmem:[%s1 + $0x8] sm:$0xff] %v105
  %202 = vst [vmem:[%s1 + $0x10] sm:$0xff] %v106
  %203 = vst [vmem:[%s1 + $0x18] sm:$0xff] %v107
  %204 = vst [vmem:[%s1 + $0x20] sm:$0xff] %v108
  %205 = vst [vmem:[%s1 + $0x28] sm:$0xff] %v109
  %206 = vst [vmem:[%s1 + $0x30] sm:$0xff] %v110
  %207 = vst [vmem:[%s1 + $0x38] sm:$0xff] %v111
  %208 = vst [vmem:[%s1 + $0x40] sm:$0xff] %v112
  %209 = vst [vmem:[%s1 + $0x48] sm:$0xff] %v113
  %210 = vst [vmem:[%s1 + $0x50] sm:$0xff] %v114
  %211 = vst [vmem:[%s1 + $0x58] sm:$0xff] %v115
  %212 = vst [vmem:[%s1 + $0x60] sm:$0xff] %v116
  %213 = vst [vmem:[%s1 + $0x68] sm:$0xff] %v117
  %214 = vst [vmem:[%s1 + $0x70] sm:$0xff] %v118
  %215 = vst [vmem:[%s1 + $0x78] sm:$0xff] %v119
  %216 = vst [vmem:[%s1 + $0x80] sm:$0xff] %v120
  %217 = vst [vmem:[%s1 + $0x88] sm:$0xff] %v121
  %218 = vst [vmem:[%s1 + $0x90] sm:$0xff] %v122
  %219 = vst [vmem:[%s1 + $0x98] sm:$0xff] %v123
  %220 = vst [vmem:[%s1 + $0xa0] sm:$0xff] %v124
  %221 = vst [vmem:[%s1 + $0xa8] sm:$0xff] %v125
  %222 = vst [vmem:[%s1 + $0xb0] sm:$0xff] %v126
  %223 = vst [vmem:[%s1 + $0xb8] sm:$0xff] %v127
  %224 = vst [vmem:[%s1 + $0xc0] sm:$0xff] %v128
  %225 = vst [vmem:[%s1 + $0xc8] sm:$0xff] %v129
  %226 = vst [vmem:[%s1 + $0xd0] sm:$0xff] %v130
  %227 = vst [vmem:[%s1 + $0xd8] sm:$0xff] %v131
  %228 = vst [vmem:[%s1 + $0xe0] sm:$0xff] %v132
  %229 = vst [vmem:[%s1 + $0xe8] sm:$0xff] %v133
  %230 = vst [vmem:[%s1 + $0xf0] sm:$0xff] %v134
  %231 = vst [vmem:[%s1 + $0xf8] sm:$0xff] %v135
  %232 = vst [vmem:[%s1 + $0x100] sm:$0xff] %v136
  %233 = vst [vmem:[%s1 + $0x108] sm:$0xff] %v137
  %234 = vst [vmem:[%s1 + $0x110] sm:$0xff] %v138
  %235 = vst [vmem:[%s1 + $0x118] sm:$0xff] %v139
  %236 = vst [vmem:[%s1 + $0x120] sm:$0xff] %v140
  %237 = vst [vmem:[%s1 + $0x128] sm:$0xff] %v141
  %238 = vst [vmem:[%s1 + $0x130] sm:$0xff] %v142
  %239 = vst [vmem:[%s1 + $0x138] sm:$0xff] %v143
  %240 = vst [vmem:[%s1 + $0x140] sm:$0xff] %v144
  %241 = vst [vmem:[%s1 + $0x148] sm:$0xff] %v145
  %242 = vst [vmem:[%s1 + $0x150] sm:$0xff] %v146
  %243 = vst [vmem:[%s1 + $0x158] sm:$0xff] %v147
  %244 = vst [vmem:[%s1 + $0x160] sm:$0xff] %v148
  %245 = vst [vmem:[%s1 + $0x168] sm:$0xff] %v149
  %246 = vst [vmem:[%s1 + $0x170] sm:$0xff] %v150
  %247 = vst [vmem:[%s1 + $0x178] sm:$0xff] %v151
  %248 = vst [vmem:[%s1 + $0x180] sm:$0xff] %v152
  %249 = vst [vmem:[%s1 + $0x188] sm:$0xff] %v153
  %250 = vst [vmem:[%s1 + $0x190] sm:$0xff] %v154
  %251 = vst [vmem:[%s1 + $0x198] sm:$0xff] %v155
  %252 = vst [vmem:[%s1 + $0x1a0] sm:$0xff] %v156
  %253 = vst [vmem:[%s1 + $0x1a8] sm:$0xff] %v157
  %254 = vst [vmem:[%s1 + $0x1b0] sm:$0xff] %v158
  %255 = vst [vmem:[%s1 + $0x1b8] sm:$0xff] %v159
  %256 = vst [vmem:[%s1 + $0x1c0] sm:$0xff] %v160
  %257 = vst [vmem:[%s1 + $0x1c8] sm:$0xff] %v161
  %258 = vst [vmem:[%s1 + $0x1d0] sm:$0xff] %v162
  %259 = vst [vmem:[%s1 + $0x1d8] sm:$0xff] %v163
  %260 = vst [vmem:[%s1 + $0x1e0] sm:$0xff] %v164
  %261 = vst [vmem:[%s1 + $0x1e8] sm:$0xff] %v165
  %262 = vst [vmem:[%s1 + $0x1f0] sm:$0xff] %v166
  %263 = vst [vmem:[%s1 + $0x1f8] sm:$0xff] %v167
  %264 = vst [vmem:[%s1 + $0x200] sm:$0xff] %v168
  %265 = vst [vmem:[%s1 + $0x208] sm:$0xff] %v169
  %266 = vst [vmem:[%s1 + $0x210] sm:$0xff] %v170
  %267 = vst [vmem:[%s1 + $0x218] sm:$0xff] %v171
  %268 = vst [vmem:[%s1 + $0x220] sm:$0xff] %v172
  %269 = vst [vmem:[%s1 + $0x228] sm:$0xff] %v173
  %270 = vst [vmem:[%s1 + $0x230] sm:$0xff] %v174
  %271 = vst [vmem:[%s1 + $0x238] sm:$0xff] %v175
  %272 = vst [vmem:[%s1 + $0x240] sm:$0xff] %v176
  %273 = vst [vmem:[%s1 + $0x248] sm:$0xff] %v177
  %274 = vst [vmem:[%s1 + $0x250] sm:$0xff] %v178
  %275 = vst [vmem:[%s1 + $0x258] sm:$0xff] %v179
  %276 = vst [vmem:[%s1 + $0x260] sm:$0xff] %v180
  %277 = vst [vmem:[%s1 + $0x268] sm:$0xff] %v181
  %278 = vst [vmem:[%s1 + $0x270] sm:$0xff] %v182
  %279 = vst [vmem:[%s1 + $0x278] sm:$0xff] %v183
  %280 = vst [vmem:[%s1 + $0x280] sm:$0xff] %v184
  %281 = vst [vmem:[%s1 + $0x288] sm:$0xff] %v185
  %282 = vst [vmem:[%s1 + $0x290] sm:$0xff] %v186
  %283 = vst [vmem:[%s1 + $0x298] sm:$0xff] %v187
  %284 = vst [vmem:[%s1 + $0x2a0] sm:$0xff] %v188
  %285 = vst [vmem:[%s1 + $0x2a8] sm:$0xff] %v189
  %286 = vst [vmem:[%s1 + $0x2b0] sm:$0xff] %v190
  %287 = vst [vmem:[%s1 + $0x2b8] sm:$0xff] %v191
  %288 = vst [vmem:[%s1 + $0x2c0] sm:$0xff] %v192
  %289 = vst [vmem:[%s1 + $0x2c8] sm:$0xff] %v193
  %290 = vst [vmem:[%s1 + $0x2d0] sm:$0xff] %v194
  %291 = vst [vmem:[%s1 + $0x2d8] sm:$0xff] %v195
  %292 = vst [vmem:[%s1 + $0x2e0] sm:$0xff] %v196
  %293 = vst [vmem:[%s1 + $0x2e8] sm:$0xff] %v197
  %294 = vst [vmem:[%s1 + $0x2f0] sm:$0xff] %v198
  %295 = vst [vmem:[%s1 + $0x2f8] sm:$0xff] %v199
  // Predicated region
  $region6: #{invert.1} parent=0 // pred_check
    _
  $region7: #{invert.1} parent=0 // pred_check_branch
    %297 = sbr.rel (0) target = $region9
  $region8: #{invert.1} parent=0 // pred_region
    _
  $region9: #{invert.1} parent=0 // pred_fallthru
    _
  // Predicated region
  $region10: #{invert.1} parent=0 // pred_check
    _
  $region11: #{invert.1} parent=0 // pred_check_branch
    %299 = sbr.rel (0) target = $region13
  $region12: #{invert.1} parent=0 // pred_region
    _
  $region13: #{invert.1} parent=0 // pred_fallthru
    _

</llo_original>
